<compile_context>
chip_gen: v6e
topology: v6e:2x2x1
jax: 0.10.0
libtpu: 0.0.40
codegen_flags: <defaults>
</compile_context>

<pallas_src>
import jax
import jax.numpy as jnp
from jax.experimental import pallas as pl
from jax.experimental.pallas import tpu as pltpu

HIDDEN = 256
MAX_TILE_B = 2048   # per review: larger tiles to amortize ~0.35us/grid-step overhead
SPLIT_B = 256       # batches >= this get >= 2 grid steps (v7x megacore sharding)


def _round_up(x, m):
    return ((x + m - 1) // m) * m


def _select_tile(b):
    if b < SPLIT_B:
        return _round_up(max(b, 8), 8)            # one tile, sublane-aligned
    # >= 2 grid steps, each a multiple of 128 lanes, capped for VMEM.
    half = -(-b // 2)
    return min(MAX_TILE_B, _round_up(half, 128))


def soft_q_kernel(xa_ref, w1_ref, b1_ref, w2_ref, b2_ref, w3_ref, b3_ref, o_ref):
    # xa_ref: (d_in, tile_b) f32 -> cast to bf16 on the VPU (has slack).
    xa = xa_ref[...].astype(jnp.bfloat16)

    # fc1: single fused matmul, f32 accumulation, (256, tile_b).
    h1 = jnp.dot(w1_ref[...], xa, preferred_element_type=jnp.float32)
    h1 = jnp.maximum(h1 + b1_ref[...], 0.0)            # bias column lane-broadcast

    # fc2: (256, 256) @ (256, tile_b).
    h2 = jnp.dot(w2_ref[...], h1.astype(jnp.bfloat16),
                 preferred_element_type=jnp.float32)
    h2 = jnp.maximum(h2 + b2_ref[...], 0.0)

    # fc3 (256 -> 1): VPU multiply + sublane (XLU) reduction -> already lane-dense.
    q = jnp.sum(h2 * w3_ref[...], axis=0, keepdims=True) + b3_ref[...]   # (1, tile_b)
    o_ref[...] = q.astype(o_ref.dtype)


@jax.jit
def soft_q_forward(x, a, kparams):
    """x: (B, n_obs), a: (B, n_act). kparams from prepare_params(). Returns (B, 1) f32."""
    w1t, b1c, w2t, b2c, w3c, b3c = kparams
    B = x.shape[0]
    d_in = w1t.shape[1]
    assert x.shape[1] + a.shape[1] == d_in

    # Single small fused XLA op: concat + transpose -> (d_in, B) f32 slab
    # (batch along lanes).  No wrapper-side bf16 cast; the kernel casts.
    xa_t = jnp.concatenate([x.T, a.T], axis=0).astype(jnp.float32)

    tile_b = _select_tile(B)
    b_pad = _round_up(B, tile_b)
    if b_pad != B:                                   # no-op for power-of-2 batches
        xa_t = jnp.pad(xa_t, ((0, 0), (0, b_pad - B)))

    grid = (b_pad // tile_b,)

    def resident(rows, cols):
        return pl.BlockSpec((rows, cols), lambda i: (0, 0))

    flops = 2 * b_pad * (d_in * HIDDEN + HIDDEN * HIDDEN + HIDDEN)
    bytes_accessed = (xa_t.size * 4 + b_pad * 4
                      + (w1t.size + w2t.size) * 2
                      + (b1c.size + b2c.size + w3c.size + b3c.size) * 4)

    out = pl.pallas_call(
        soft_q_kernel,
        out_shape=jax.ShapeDtypeStruct((1, b_pad), jnp.float32),
        grid=grid,
        in_specs=[
            pl.BlockSpec((d_in, tile_b), lambda i: (0, i)),   # activations, streamed
            resident(HIDDEN, d_in),                           # W1ᵀ (bf16), VMEM-resident
            resident(HIDDEN, 1),                              # b1 column (f32)
            resident(HIDDEN, HIDDEN),                         # W2ᵀ (bf16)
            resident(HIDDEN, 1),                              # b2 column
            resident(HIDDEN, 1),                              # w3 column (f32, VPU path)
            resident(1, 1),                                   # b3
        ],
        out_specs=pl.BlockSpec((1, tile_b), lambda i: (0, i)),  # lane-dense output
        compiler_params=pltpu.CompilerParams(
            dimension_semantics=("parallel",),
            vmem_limit_bytes=32 * 1024 * 1024,
        ),
        cost_estimate=pl.CostEstimate(
            flops=flops, transcendentals=0, bytes_accessed=bytes_accessed),
    )(xa_t, w1t, b1c, w2t, b2c, w3c, b3c)

    return out[0, :B].reshape(B, 1)


def prepare_params(params):
    """Hoisted (one-time) conversion of PyTorch-style params to kernel format."""
    w1, b1, w2, b2, w3, b3 = params
    hidden = w1.shape[1]
    return (
        jnp.asarray(w1).T.astype(jnp.bfloat16),                  # (256, d_in)
        jnp.asarray(b1).reshape(hidden, 1).astype(jnp.float32),  # (256, 1)
        jnp.asarray(w2).T.astype(jnp.bfloat16),                  # (256, 256)
        jnp.asarray(b2).reshape(hidden, 1).astype(jnp.float32),  # (256, 1)
        jnp.asarray(w3).reshape(hidden, 1).astype(jnp.float32),  # (256, 1)
        jnp.asarray(b3).reshape(1, 1).astype(jnp.float32),       # (1, 1)
    )


def init_params(key, n_obs, n_act, hidden=HIDDEN):
    """PyTorch nn.Linear default init: U(-1/sqrt(fan_in), 1/sqrt(fan_in)).
    Weights stored (in_features, out_features)."""
    d_in = n_obs + n_act
    ks = jax.random.split(key, 6)

    def lin(kw, kb, fan_in, fan_out):
        bound = 1.0 / jnp.sqrt(jnp.float32(fan_in))
        w = jax.random.uniform(kw, (fan_in, fan_out), jnp.float32, -bound, bound)
        b = jax.random.uniform(kb, (1, fan_out), jnp.float32, -bound, bound)
        return w, b

    w1, b1 = lin(ks[0], ks[1], d_in, hidden)
    w2, b2 = lin(ks[2], ks[3], hidden, hidden)
    w3, b3 = lin(ks[4], ks[5], hidden, 1)
    return (w1, b1, w2, b2, w3, b3)


def soft_q_ref_f32(x, a, params):
    """Pure-JAX f32 reference (PyTorch semantics)."""
    w1, b1, w2, b2, w3, b3 = params
    xa = jnp.concatenate([x, a], axis=1)
    h1 = jax.nn.relu(xa @ w1 + b1)
    h2 = jax.nn.relu(h1 @ w2 + b2)
    return h2 @ w3 + b3


def soft_q_ref_mixed(x, a, params):
    """Reference mirroring the kernel's bf16-operand / f32-accumulate recipe."""
    w1, b1, w2, b2, w3, b3 = params
    xa = jnp.concatenate([x, a], axis=1).astype(jnp.bfloat16)
    h1 = jnp.dot(xa, w1.astype(jnp.bfloat16),
                 preferred_element_type=jnp.float32) + b1
    h1 = jnp.maximum(h1, 0.0)
    h2 = jnp.dot(h1.astype(jnp.bfloat16), w2.astype(jnp.bfloat16),
                 preferred_element_type=jnp.float32) + b2
    h2 = jnp.maximum(h2, 0.0)
    return h2 @ w3 + b3.reshape(1, 1)


if __name__ == "__main__":
    key = jax.random.PRNGKey(0)
    k_x, k_a, k_p = jax.random.split(key, 3)

    batch, n_obs, n_act = 4, 24, 8
    x = jax.random.normal(k_x, (batch, n_obs), jnp.float32)
    a = jax.random.normal(k_a, (batch, n_act), jnp.float32)
    params = init_params(k_p, n_obs, n_act)
    kparams = prepare_params(params)       # one-time weight cast/transpose

    out = jax.block_until_ready(soft_q_forward(x, a, kparams))
    assert out.shape == (batch, 1)

    # Tight check vs a reference using the same mixed-precision recipe.
    ref_mixed = jax.block_until_ready(soft_q_ref_mixed(x, a, params))
    assert jnp.allclose(out, ref_mixed, atol=2e-3, rtol=2e-3), (out, ref_mixed)

    # Looser check vs the pure-f32 PyTorch-equivalent reference
    # (bf16 MXU operands => ~1e-2-scale differences expected).
    ref_f32 = jax.block_until_ready(soft_q_ref_f32(x, a, params))
    assert jnp.allclose(out, ref_f32, atol=5e-2, rtol=5e-2), (out, ref_f32)

    print("KERNEL_OK")
</pallas_src>

<mosaic_0001>
module attributes {stable_mosaic.version = 11 : i64} {
  func.func @soft_q_kernel(%arg0: i32, %arg1: memref<32x8xf32, #tpu.memory_space<vmem>>, %arg2: memref<256x32xbf16, #tpu.memory_space<vmem>>, %arg3: memref<256x1xf32, #tpu.memory_space<vmem>>, %arg4: memref<256x256xbf16, #tpu.memory_space<vmem>>, %arg5: memref<256x1xf32, #tpu.memory_space<vmem>>, %arg6: memref<256x1xf32, #tpu.memory_space<vmem>>, %arg7: memref<1x1xf32, #tpu.memory_space<vmem>>, %arg8: memref<1x8xf32, #tpu.memory_space<vmem>>) attributes {dimension_semantics = [#tpu.dimension_semantics<parallel>], iteration_bounds = array<i64: 1>, scalar_prefetch = 0 : i64, scratch_operands = 0 : i64, tpu.core_type = #tpu.core_type<tc>, window_params = [{transform_indices = @transform_0, window_bounds = array<i64: 32, 8>}, {pipeline_mode = #tpu.pipeline_mode<synchronous>, transform_indices = @transform_1, window_bounds = array<i64: 256, 32>}, {pipeline_mode = #tpu.pipeline_mode<synchronous>, transform_indices = @transform_2, window_bounds = array<i64: 256, 1>}, {pipeline_mode = #tpu.pipeline_mode<synchronous>, transform_indices = @transform_3, window_bounds = array<i64: 256, 256>}, {pipeline_mode = #tpu.pipeline_mode<synchronous>, transform_indices = @transform_4, window_bounds = array<i64: 256, 1>}, {pipeline_mode = #tpu.pipeline_mode<synchronous>, transform_indices = @transform_5, window_bounds = array<i64: 256, 1>}, {pipeline_mode = #tpu.pipeline_mode<synchronous>, transform_indices = @transform_6, window_bounds = array<i64: 1, 1>}, {transform_indices = @transform_7, window_bounds = array<i64: 1, 8>}]} {
    %c0 = arith.constant 0 : index
    %c0_0 = arith.constant 0 : index
    %0 = vector.load %arg1[%c0, %c0_0] : memref<32x8xf32, #tpu.memory_space<vmem>>, vector<32x8xf32>
    %1 = arith.truncf %0 : vector<32x8xf32> to vector<32x8xbf16>
    %c0_1 = arith.constant 0 : index
    %c0_2 = arith.constant 0 : index
    %2 = vector.load %arg2[%c0_1, %c0_2] : memref<256x32xbf16, #tpu.memory_space<vmem>>, vector<256x32xbf16>
    %cst = arith.constant dense<0.000000e+00> : vector<256x8xf32>
    %3 = tpu.matmul %2, %1, %cst {dimension_numbers = #tpu.dot_dimension_numbers<[1], [0], [0], [1], [0, 0, 1, 1], [], []>} : vector<256x32xbf16>, vector<32x8xbf16>, vector<256x8xf32> -> vector<256x8xf32>
    %c0_3 = arith.constant 0 : index
    %c0_4 = arith.constant 0 : index
    %4 = vector.load %arg3[%c0_3, %c0_4] : memref<256x1xf32, #tpu.memory_space<vmem>>, vector<256x1xf32>
    %5 = vector.broadcast %4 : vector<256x1xf32> to vector<256x8xf32>
    %6 = arith.addf %3, %5 : vector<256x8xf32>
    %cst_5 = arith.constant 0.000000e+00 : f32
    %7 = vector.broadcast %cst_5 : f32 to vector<256x8xf32>
    %8 = arith.maximumf %6, %7 : vector<256x8xf32>
    %c0_6 = arith.constant 0 : index
    %c0_7 = arith.constant 0 : index
    %9 = vector.load %arg4[%c0_6, %c0_7] : memref<256x256xbf16, #tpu.memory_space<vmem>>, vector<256x256xbf16>
    %10 = arith.truncf %8 : vector<256x8xf32> to vector<256x8xbf16>
    %cst_8 = arith.constant dense<0.000000e+00> : vector<256x8xf32>
    %11 = tpu.matmul %9, %10, %cst_8 {dimension_numbers = #tpu.dot_dimension_numbers<[1], [0], [0], [1], [0, 0, 1, 1], [], []>} : vector<256x256xbf16>, vector<256x8xbf16>, vector<256x8xf32> -> vector<256x8xf32>
    %c0_9 = arith.constant 0 : index
    %c0_10 = arith.constant 0 : index
    %12 = vector.load %arg5[%c0_9, %c0_10] : memref<256x1xf32, #tpu.memory_space<vmem>>, vector<256x1xf32>
    %13 = vector.broadcast %12 : vector<256x1xf32> to vector<256x8xf32>
    %14 = arith.addf %11, %13 : vector<256x8xf32>
    %cst_11 = arith.constant 0.000000e+00 : f32
    %15 = vector.broadcast %cst_11 : f32 to vector<256x8xf32>
    %16 = arith.maximumf %14, %15 : vector<256x8xf32>
    %c0_12 = arith.constant 0 : index
    %c0_13 = arith.constant 0 : index
    %17 = vector.load %arg6[%c0_12, %c0_13] : memref<256x1xf32, #tpu.memory_space<vmem>>, vector<256x1xf32>
    %18 = vector.broadcast %17 : vector<256x1xf32> to vector<256x8xf32>
    %19 = arith.mulf %16, %18 : vector<256x8xf32>
    %cst_14 = arith.constant dense<0.000000e+00> : vector<8xf32>
    %20 = vector.multi_reduction <add>, %19, %cst_14 [0] : vector<256x8xf32> to vector<8xf32>
    %21 = vector.shape_cast %20 : vector<8xf32> to vector<1x8xf32>
    %c0_15 = arith.constant 0 : index
    %c0_16 = arith.constant 0 : index
    %22 = vector.load %arg7[%c0_15, %c0_16] : memref<1x1xf32, #tpu.memory_space<vmem>>, vector<1x1xf32>
    %23 = vector.broadcast %22 : vector<1x1xf32> to vector<1x8xf32>
    %24 = arith.addf %21, %23 : vector<1x8xf32>
    %c0_17 = arith.constant 0 : index
    %c0_18 = arith.constant 0 : index
    %25 = vector.load %arg8[%c0_17, %c0_18] : memref<1x8xf32, #tpu.memory_space<vmem>>, vector<1x8xf32>
    tpu.vector_store %arg8[%c0_17, %c0_18], %24 {strides = array<i32>} : memref<1x8xf32, #tpu.memory_space<vmem>>, vector<1x8xf32>,
    return
  }
  func.func @transform_0(%arg0: i32) -> (i32, i32) {
    %c0_i32 = arith.constant 0 : i32
    %c0_i32_0 = arith.constant 0 : i32
    return %c0_i32, %arg0 : i32, i32
  }
  func.func @transform_1(%arg0: i32) -> (i32, i32) {
    %c0_i32 = arith.constant 0 : i32
    %c0_i32_0 = arith.constant 0 : i32
    %c0_i32_1 = arith.constant 0 : i32
    return %c0_i32, %c0_i32_0 : i32, i32
  }
  func.func @transform_2(%arg0: i32) -> (i32, i32) {
    %c0_i32 = arith.constant 0 : i32
    %c0_i32_0 = arith.constant 0 : i32
    %c0_i32_1 = arith.constant 0 : i32
    return %c0_i32, %c0_i32_0 : i32, i32
  }
  func.func @transform_3(%arg0: i32) -> (i32, i32) {
    %c0_i32 = arith.constant 0 : i32
    %c0_i32_0 = arith.constant 0 : i32
    %c0_i32_1 = arith.constant 0 : i32
    return %c0_i32, %c0_i32_0 : i32, i32
  }
  func.func @transform_4(%arg0: i32) -> (i32, i32) {
    %c0_i32 = arith.constant 0 : i32
    %c0_i32_0 = arith.constant 0 : i32
    %c0_i32_1 = arith.constant 0 : i32
    return %c0_i32, %c0_i32_0 : i32, i32
  }
  func.func @transform_5(%arg0: i32) -> (i32, i32) {
    %c0_i32 = arith.constant 0 : i32
    %c0_i32_0 = arith.constant 0 : i32
    %c0_i32_1 = arith.constant 0 : i32
    return %c0_i32, %c0_i32_0 : i32, i32
  }
  func.func @transform_6(%arg0: i32) -> (i32, i32) {
    %c0_i32 = arith.constant 0 : i32
    %c0_i32_0 = arith.constant 0 : i32
    %c0_i32_1 = arith.constant 0 : i32
    return %c0_i32, %c0_i32_0 : i32, i32
  }
  func.func @transform_7(%arg0: i32) -> (i32, i32) {
    %c0_i32 = arith.constant 0 : i32
    %c0_i32_0 = arith.constant 0 : i32
    return %c0_i32, %arg0 : i32, i32
  }
}

</mosaic_0001>

<llo_original>
// kernel: soft_q_forward.1
$region0: #{soft_q_forward.1}
  #allocation0 [shape = 'u32[]', space=smem, size = 0x4, offset = 0x4, fixed_abs, tag = 'smem constant byte address 0x4 - core index']
  #allocation1 [shape = 'u32[144,128]{1,0:T(1,128)}', space=vmem, size = 0x12000, scoped, tag = 'internal scratch']
  #allocation2 [shape = 'f32[1,1]{1,0:T(1,128)S(1)}', space=vmem, size = 0x200, scoped, tag = 'scoped memory for soft_q_forward.1']
  %s0 = inlined_call_operand.vmem [shape: f32[32,8], index: 0, kind: input, shape index: {}]
  %s1 = inlined_call_operand.vmem [shape: bf16[256,32], index: 1, kind: input, shape index: {}]
  %s2 = inlined_call_operand.vmem [shape: f32[256,1], index: 2, kind: input, shape index: {}]
  %s3 = inlined_call_operand.vmem [shape: bf16[256,256], index: 3, kind: input, shape index: {}]
  %s4 = inlined_call_operand.vmem [shape: f32[256,1], index: 4, kind: input, shape index: {}]
  %s5 = inlined_call_operand.vmem [shape: f32[256,1], index: 5, kind: input, shape index: {}]
  %s6 = inlined_call_operand.<no memory space> [shape: f32[1,1], index: 6, kind: input, shape index: {}]
  %s7 = inlined_call_operand.vmem [shape: f32[1,8], index: 7, kind: output, shape index: {}]
  %s8 = sld [smem:[#allocation0]]
  $region38: #{soft_q_forward.1} parent=0
    _
  %s10 = ssub.s32 1, %s8
  %s11 = scalar_select 0, %s10, %s8
  %v12 = vstv %s6
  %13 = vst [vmem:[#allocation2] sm:$0x1] %v12
  // Predicated region
  $region2: #{soft_q_forward.1} parent=0 // pred_check
    _
  $region3: #{soft_q_forward.1} parent=0 // pred_check_branch
    %15 = sbr.rel (0) target = $region5
  $region4: #{soft_q_forward.1} parent=0 // pred_region
    _
  $region5: #{soft_q_forward.1} parent=0 // pred_fallthru
    _
  // Predicated region
  $region6: #{soft_q_forward.1} parent=0 // pred_check
    _
  $region7: #{soft_q_forward.1} parent=0 // pred_check_branch
    %17 = sbr.rel (0) target = $region9
  $region8: #{soft_q_forward.1} parent=0 // pred_region
    _
  $region9: #{soft_q_forward.1} parent=0 // pred_fallthru
    _
  // Predicated region
  $region10: #{soft_q_forward.1} parent=0 // pred_check
    _
  $region11: #{soft_q_forward.1} parent=0 // pred_check_branch
    %19 = sbr.rel (0) target = $region13
  $region12: #{soft_q_forward.1} parent=0 // pred_region
    _
  $region13: #{soft_q_forward.1} parent=0 // pred_fallthru
    _
  // Predicated region
  $region14: #{soft_q_forward.1} parent=0 // pred_check
    _
  $region15: #{soft_q_forward.1} parent=0 // pred_check_branch
    %21 = sbr.rel (0) target = $region17
  $region16: #{soft_q_forward.1} parent=0 // pred_region
    _
  $region17: #{soft_q_forward.1} parent=0 // pred_fallthru
    _
  // Predicated region
  $region18: #{soft_q_forward.1} parent=0 // pred_check
    _
  $region19: #{soft_q_forward.1} parent=0 // pred_check_branch
    %23 = sbr.rel (0) target = $region21
  $region20: #{soft_q_forward.1} parent=0 // pred_region
    _
  $region21: #{soft_q_forward.1} parent=0 // pred_fallthru
    _
  // Predicated region
  $region22: #{soft_q_forward.1} parent=0 // pred_check
    _
  $region23: #{soft_q_forward.1} parent=0 // pred_check_branch
    %25 = sbr.rel (0) target = $region25
  $region24: #{soft_q_forward.1} parent=0 // pred_region
    _
  $region25: #{soft_q_forward.1} parent=0 // pred_fallthru
    _
  // Predicated region
  $region26: #{soft_q_forward.1} parent=0 // pred_check
    _
  $region27: #{soft_q_forward.1} parent=0 // pred_check_branch
    %27 = sbr.rel (0) target = $region29
  $region28: #{soft_q_forward.1} parent=0 // pred_region
    _
  $region29: #{soft_q_forward.1} parent=0 // pred_fallthru
    _
  %v29 = vld [vmem:[%s0] sm:$0xff]
  %v30 = vld [vmem:[%s0 + $0x8] sm:$0xff]
  %v31 = vld [vmem:[%s0 + $0x10] sm:$0xff]
  %v32 = vld [vmem:[%s0 + $0x18] sm:$0xff]
  %v33 = vpack.c.bf16 %v30, %v29
  %v34 = vpack.c.bf16 %v32, %v31
  %v35 = vld [vmem:[%s1] sm:$0xf]
  %v36 = vld [vmem:[%s1 + $0x4] sm:$0xf]
  %v37 = vld [vmem:[%s1 + $0x8] sm:$0xf]
  %v38 = vld [vmem:[%s1 + $0xc] sm:$0xf]
  %v39 = vld [vmem:[%s1 + $0x10] sm:$0xf]
  %v40 = vld [vmem:[%s1 + $0x14] sm:$0xf]
  %v41 = vld [vmem:[%s1 + $0x18] sm:$0xf]
  %v42 = vld [vmem:[%s1 + $0x1c] sm:$0xf]
  %v43 = vld [vmem:[%s1 + $0x20] sm:$0xf]
  %v44 = vld [vmem:[%s1 + $0x24] sm:$0xf]
  %v45 = vld [vmem:[%s1 + $0x28] sm:$0xf]
  %v46 = vld [vmem:[%s1 + $0x2c] sm:$0xf]
  %v47 = vld [vmem:[%s1 + $0x30] sm:$0xf]
  %v48 = vld [vmem:[%s1 + $0x34] sm:$0xf]
  %v49 = vld [vmem:[%s1 + $0x38] sm:$0xf]
  %v50 = vld [vmem:[%s1 + $0x3c] sm:$0xf]
  %v51 = vld [vmem:[%s1 + $0x40] sm:$0xf]
  %v52 = vld [vmem:[%s1 + $0x44] sm:$0xf]
  %v53 = vld [vmem:[%s1 + $0x48] sm:$0xf]
  %v54 = vld [vmem:[%s1 + $0x4c] sm:$0xf]
  %v55 = vld [vmem:[%s1 + $0x50] sm:$0xf]
  %v56 = vld [vmem:[%s1 + $0x54] sm:$0xf]
  %v57 = vld [vmem:[%s1 + $0x58] sm:$0xf]
  %v58 = vld [vmem:[%s1 + $0x5c] sm:$0xf]
  %v59 = vld [vmem:[%s1 + $0x60] sm:$0xf]
  %v60 = vld [vmem:[%s1 + $0x64] sm:$0xf]
  %v61 = vld [vmem:[%s1 + $0x68] sm:$0xf]
  %v62 = vld [vmem:[%s1 + $0x6c] sm:$0xf]
  %v63 = vld [vmem:[%s1 + $0x70] sm:$0xf]
  %v64 = vld [vmem:[%s1 + $0x74] sm:$0xf]
  %v65 = vld [vmem:[%s1 + $0x78] sm:$0xf]
  %v66 = vld [vmem:[%s1 + $0x7c] sm:$0xf]
  %v67 = vld [vmem:[%s2] sm:$0xff]
  %v68 = vld [vmem:[%s2 + $0x8] sm:$0xff]
  %v69 = vld [vmem:[%s2 + $0x10] sm:$0xff]
  %v70 = vld [vmem:[%s2 + $0x18] sm:$0xff]
  %v71 = vld [vmem:[%s2 + $0x20] sm:$0xff]
  %v72 = vld [vmem:[%s2 + $0x28] sm:$0xff]
  %v73 = vld [vmem:[%s2 + $0x30] sm:$0xff]
  %v74 = vld [vmem:[%s2 + $0x38] sm:$0xff]
  %v75 = vld [vmem:[%s2 + $0x40] sm:$0xff]
  %v76 = vld [vmem:[%s2 + $0x48] sm:$0xff]
  %v77 = vld [vmem:[%s2 + $0x50] sm:$0xff]
  %v78 = vld [vmem:[%s2 + $0x58] sm:$0xff]
  %v79 = vld [vmem:[%s2 + $0x60] sm:$0xff]
  %v80 = vld [vmem:[%s2 + $0x68] sm:$0xff]
  %v81 = vld [vmem:[%s2 + $0x70] sm:$0xff]
  %v82 = vld [vmem:[%s2 + $0x78] sm:$0xff]
  %v83 = vld [vmem:[%s2 + $0x80] sm:$0xff]
  %v84 = vld [vmem:[%s2 + $0x88] sm:$0xff]
  %v85 = vld [vmem:[%s2 + $0x90] sm:$0xff]
  %v86 = vld [vmem:[%s2 + $0x98] sm:$0xff]
  %v87 = vld [vmem:[%s2 + $0xa0] sm:$0xff]
  %v88 = vld [vmem:[%s2 + $0xa8] sm:$0xff]
  %v89 = vld [vmem:[%s2 + $0xb0] sm:$0xff]
  %v90 = vld [vmem:[%s2 + $0xb8] sm:$0xff]
  %v91 = vld [vmem:[%s2 + $0xc0] sm:$0xff]
  %v92 = vld [vmem:[%s2 + $0xc8] sm:$0xff]
  %v93 = vld [vmem:[%s2 + $0xd0] sm:$0xff]
  %v94 = vld [vmem:[%s2 + $0xd8] sm:$0xff]
  %v95 = vld [vmem:[%s2 + $0xe0] sm:$0xff]
  %v96 = vld [vmem:[%s2 + $0xe8] sm:$0xff]
  %v97 = vld [vmem:[%s2 + $0xf0] sm:$0xff]
  %v98 = vld [vmem:[%s2 + $0xf8] sm:$0xff]
  %100 = vset.pattern.permute.xlu0 0
  %101 = vperm.xlu0 %100, %v67
  %v102 = vpop.permute.xlu0 %101
  %105 = vset.pattern.permute.xlu0 0
  %106 = vperm.xlu0 %105, %v68
  %v107 = vpop.permute.xlu0 %106
  %110 = vset.pattern.permute.xlu0 0
  %111 = vperm.xlu0 %110, %v69
  %v112 = vpop.permute.xlu0 %111
  %115 = vset.pattern.permute.xlu0 0
  %116 = vperm.xlu0 %115, %v70
  %v117 = vpop.permute.xlu0 %116
  %120 = vset.pattern.permute.xlu0 0
  %121 = vperm.xlu0 %120, %v71
  %v122 = vpop.permute.xlu0 %121
  %125 = vset.pattern.permute.xlu0 0
  %126 = vperm.xlu0 %125, %v72
  %v127 = vpop.permute.xlu0 %126
  %130 = vset.pattern.permute.xlu0 0
  %131 = vperm.xlu0 %130, %v73
  %v132 = vpop.permute.xlu0 %131
  %135 = vset.pattern.permute.xlu0 0
  %136 = vperm.xlu0 %135, %v74
  %v137 = vpop.permute.xlu0 %136
  %140 = vset.pattern.permute.xlu0 0
  %141 = vperm.xlu0 %140, %v75
  %v142 = vpop.permute.xlu0 %141
  %145 = vset.pattern.permute.xlu0 0
  %146 = vperm.xlu0 %145, %v76
  %v147 = vpop.permute.xlu0 %146
  %150 = vset.pattern.permute.xlu0 0
  %151 = vperm.xlu0 %150, %v77
  %v152 = vpop.permute.xlu0 %151
  %155 = vset.pattern.permute.xlu0 0
  %156 = vperm.xlu0 %155, %v78
  %v157 = vpop.permute.xlu0 %156
  %160 = vset.pattern.permute.xlu0 0
  %161 = vperm.xlu0 %160, %v79
  %v162 = vpop.permute.xlu0 %161
  %165 = vset.pattern.permute.xlu0 0
  %166 = vperm.xlu0 %165, %v80
  %v167 = vpop.permute.xlu0 %166
  %170 = vset.pattern.permute.xlu0 0
  %171 = vperm.xlu0 %170, %v81
  %v172 = vpop.permute.xlu0 %171
  %175 = vset.pattern.permute.xlu0 0
  %176 = vperm.xlu0 %175, %v82
  %v177 = vpop.permute.xlu0 %176
  %180 = vset.pattern.permute.xlu0 0
  %181 = vperm.xlu0 %180, %v83
  %v182 = vpop.permute.xlu0 %181
  %185 = vset.pattern.permute.xlu0 0
  %186 = vperm.xlu0 %185, %v84
  %v187 = vpop.permute.xlu0 %186
  %190 = vset.pattern.permute.xlu0 0
  %191 = vperm.xlu0 %190, %v85
  %v192 = vpop.permute.xlu0 %191
  %195 = vset.pattern.permute.xlu0 0
  %196 = vperm.xlu0 %195, %v86
  %v197 = vpop.permute.xlu0 %196
  %200 = vset.pattern.permute.xlu0 0
  %201 = vperm.xlu0 %200, %v87
  %v202 = vpop.permute.xlu0 %201
  %205 = vset.pattern.permute.xlu0 0
  %206 = vperm.xlu0 %205, %v88
  %v207 = vpop.permute.xlu0 %206
  %210 = vset.pattern.permute.xlu0 0
  %211 = vperm.xlu0 %210, %v89
  %v212 = vpop.permute.xlu0 %211
  %215 = vset.pattern.permute.xlu0 0
  %216 = vperm.xlu0 %215, %v90
  %v217 = vpop.permute.xlu0 %216
  %220 = vset.pattern.permute.xlu0 0
  %221 = vperm.xlu0 %220, %v91
  %v222 = vpop.permute.xlu0 %221
  %225 = vset.pattern.permute.xlu0 0
  %226 = vperm.xlu0 %225, %v92
  %v227 = vpop.permute.xlu0 %226
  %230 = vset.pattern.permute.xlu0 0
  %231 = vperm.xlu0 %230, %v93
  %v232 = vpop.permute.xlu0 %231
  %235 = vset.pattern.permute.xlu0 0
  %236 = vperm.xlu0 %235, %v94
  %v237 = vpop.permute.xlu0 %236
  %240 = vset.pattern.permute.xlu0 0
  %241 = vperm.xlu0 %240, %v95
  %v242 = vpop.permute.xlu0 %241
  %245 = vset.pattern.permute.xlu0 0
  %246 = vperm.xlu0 %245, %v96
  %v247 = vpop.permute.xlu0 %246
  %250 = vset.pattern.permute.xlu0 0
  %251 = vperm.xlu0 %250, %v97
  %v252 = vpop.permute.xlu0 %251
  %255 = vset.pattern.permute.xlu0 0
  %256 = vperm.xlu0 %255, %v98
  %v257 = vpop.permute.xlu0 %256
  %v291 = vunpack.c.l.b16 %v35
  %v292 = vunpack.c.l.b16 %v36
  %v293 = vunpack.c.l.b16 %v37
  %v294 = vunpack.c.l.b16 %v38
  %v295 = vunpack.c.l.b16 %v39
  %v296 = vunpack.c.l.b16 %v40
  %v297 = vunpack.c.l.b16 %v41
  %v298 = vunpack.c.l.b16 %v42
  %v299 = vunpack.c.l.b16 %v43
  %v300 = vunpack.c.l.b16 %v44
  %v301 = vunpack.c.l.b16 %v45
  %v302 = vunpack.c.l.b16 %v46
  %v303 = vunpack.c.l.b16 %v47
  %v304 = vunpack.c.l.b16 %v48
  %v305 = vunpack.c.l.b16 %v49
  %v306 = vunpack.c.l.b16 %v50
  %v307 = vunpack.c.l.b16 %v51
  %v308 = vunpack.c.l.b16 %v52
  %v309 = vunpack.c.l.b16 %v53
  %v310 = vunpack.c.l.b16 %v54
  %v311 = vunpack.c.l.b16 %v55
  %v312 = vunpack.c.l.b16 %v56
  %v313 = vunpack.c.l.b16 %v57
  %v314 = vunpack.c.l.b16 %v58
  %v315 = vunpack.c.l.b16 %v59
  %v316 = vunpack.c.l.b16 %v60
  %v317 = vunpack.c.l.b16 %v61
  %v318 = vunpack.c.l.b16 %v62
  %v319 = vunpack.c.l.b16 %v63
  %v320 = vunpack.c.l.b16 %v64
  %v321 = vunpack.c.l.b16 %v65
  %v322 = vunpack.c.l.b16 %v66
  %v323 = vpack.c.b16 %v292, %v291
  %v324 = vpack.c.b16 %v294, %v293
  %v325 = vpack.c.b16 %v296, %v295
  %v326 = vpack.c.b16 %v298, %v297
  %v327 = vpack.c.b16 %v300, %v299
  %v328 = vpack.c.b16 %v302, %v301
  %v329 = vpack.c.b16 %v304, %v303
  %v330 = vpack.c.b16 %v306, %v305
  %v331 = vpack.c.b16 %v308, %v307
  %v332 = vpack.c.b16 %v310, %v309
  %v333 = vpack.c.b16 %v312, %v311
  %v334 = vpack.c.b16 %v314, %v313
  %v335 = vpack.c.b16 %v316, %v315
  %v336 = vpack.c.b16 %v318, %v317
  %v337 = vpack.c.b16 %v320, %v319
  %v338 = vpack.c.b16 %v322, %v321
  %vm339 = vcmask 261120
  %v341 = vsel %vm339, %v323, 0
  %v344 = vsel %vm339, %v324, 0
  %v347 = vsel %vm339, %v325, 0
  %v350 = vsel %vm339, %v326, 0
  %v353 = vsel %vm339, %v327, 0
  %v356 = vsel %vm339, %v328, 0
  %v359 = vsel %vm339, %v329, 0
  %v362 = vsel %vm339, %v330, 0
  %v365 = vsel %vm339, %v331, 0
  %v368 = vsel %vm339, %v332, 0
  %v371 = vsel %vm339, %v333, 0
  %v374 = vsel %vm339, %v334, 0
  %v377 = vsel %vm339, %v335, 0
  %v380 = vsel %vm339, %v336, 0
  %v383 = vsel %vm339, %v337, 0
  %v386 = vsel %vm339, %v338, 0
  %388 = vmatprep.subr.bf16.mxu0 0
  %389 = vmatpush1.bf16.msra.mxu0 0
  %390 = vmatprep.subr.bf16.mxu0 0
  %391 = vmatpush1.bf16.msra.mxu0 0
  %392 = vmatprep.subr.bf16.mxu0 0
  %393 = vmatpush1.bf16.msra.mxu0 0
  %394 = vmatprep.subr.bf16.mxu0 0
  %395 = vmatpush1.bf16.msra.mxu0 0
  %396 = vmatprep.subr.bf16.mxu0 0
  %397 = vmatpush1.bf16.msra.mxu0 0
  %398 = vmatprep.subr.bf16.mxu0 0
  %399 = vmatpush1.bf16.msra.mxu0 0
  %400 = vmatprep.subr.bf16.mxu0 0
  %401 = vmatpush1.bf16.msra.mxu0 %v34
  %402 = vmatprep.subr.bf16.mxu0 0
  %403 = vmatpush1.bf16.msra.mxu0 %v33
  %404 = vmatprep.subr.bf16.mxu0 0
  %405 = vmatpush2.bf16.msra.mxu0 0
  %406 = vmatprep.subr.bf16.mxu0 0
  %407 = vmatpush2.bf16.msra.mxu0 0
  %408 = vmatprep.subr.bf16.mxu0 0
  %409 = vmatpush2.bf16.msra.mxu0 0
  %410 = vmatprep.subr.bf16.mxu0 0
  %411 = vmatpush2.bf16.msra.mxu0 0
  %412 = vmatprep.subr.bf16.mxu0 0
  %413 = vmatpush2.bf16.msra.mxu0 0
  %414 = vmatprep.subr.bf16.mxu0 0
  %415 = vmatpush2.bf16.msra.mxu0 0
  %416 = vmatprep.subr.bf16.mxu0 0
  %417 = vmatpush2.bf16.msra.mxu0 0
  %418 = vmatprep.subr.bf16.mxu0 0
  %419 = vmatpush2.bf16.msra.mxu0 0
  %420 = vmatprep.mubr.bf16.mxu0 0
  %421 = vmatmul.mubr.bf16.gmra.mxu0 %v341
  %v422 = vpop.f32.mrf.mxu0
  %v423 = vadd.f32 %v102, %v422
  %v424 = vpop.f32.mrf.mxu0
  %v425 = vpop.f32.mrf.mxu0
  %v426 = vadd.f32 %v107, %v425
  %v427 = vpop.f32.mrf.mxu0
  %428 = vmatprep.mubr.bf16.mxu0 0
  %429 = vmatmul.mubr.bf16.gmra.mxu0 %v344
  %v430 = vpop.f32.mrf.mxu0
  %v431 = vadd.f32 %v112, %v430
  %v432 = vpop.f32.mrf.mxu0
  %v433 = vpop.f32.mrf.mxu0
  %v434 = vadd.f32 %v117, %v433
  %v435 = vpop.f32.mrf.mxu0
  %436 = vmatprep.mubr.bf16.mxu0 0
  %437 = vmatmul.mubr.bf16.gmra.mxu0 %v347
  %v438 = vpop.f32.mrf.mxu0
  %v439 = vadd.f32 %v122, %v438
  %v440 = vpop.f32.mrf.mxu0
  %v441 = vpop.f32.mrf.mxu0
  %v442 = vadd.f32 %v127, %v441
  %v443 = vpop.f32.mrf.mxu0
  %444 = vmatprep.mubr.bf16.mxu0 0
  %445 = vmatmul.mubr.bf16.gmra.mxu0 %v350
  %v446 = vpop.f32.mrf.mxu0
  %v447 = vadd.f32 %v132, %v446
  %v448 = vpop.f32.mrf.mxu0
  %v449 = vpop.f32.mrf.mxu0
  %v450 = vadd.f32 %v137, %v449
  %v451 = vpop.f32.mrf.mxu0
  %452 = vmatprep.mubr.bf16.mxu0 0
  %453 = vmatmul.mubr.bf16.gmra.mxu0 %v353
  %v454 = vpop.f32.mrf.mxu0
  %v455 = vadd.f32 %v142, %v454
  %v456 = vpop.f32.mrf.mxu0
  %v457 = vpop.f32.mrf.mxu0
  %v458 = vadd.f32 %v147, %v457
  %v459 = vpop.f32.mrf.mxu0
  %460 = vmatprep.mubr.bf16.mxu0 0
  %461 = vmatmul.mubr.bf16.gmra.mxu0 %v356
  %v462 = vpop.f32.mrf.mxu0
  %v463 = vadd.f32 %v152, %v462
  %v464 = vpop.f32.mrf.mxu0
  %v465 = vpop.f32.mrf.mxu0
  %v466 = vadd.f32 %v157, %v465
  %v467 = vpop.f32.mrf.mxu0
  %468 = vmatprep.mubr.bf16.mxu0 0
  %469 = vmatmul.mubr.bf16.gmra.mxu0 %v359
  %v470 = vpop.f32.mrf.mxu0
  %v471 = vadd.f32 %v162, %v470
  %v472 = vpop.f32.mrf.mxu0
  %v473 = vpop.f32.mrf.mxu0
  %v474 = vadd.f32 %v167, %v473
  %v475 = vpop.f32.mrf.mxu0
  %476 = vmatprep.mubr.bf16.mxu0 0
  %477 = vmatmul.mubr.bf16.gmra.mxu0 %v362
  %v478 = vpop.f32.mrf.mxu0
  %v479 = vadd.f32 %v172, %v478
  %v480 = vpop.f32.mrf.mxu0
  %v481 = vpop.f32.mrf.mxu0
  %v482 = vadd.f32 %v177, %v481
  %v483 = vpop.f32.mrf.mxu0
  %484 = vmatprep.mubr.bf16.mxu0 0
  %485 = vmatmul.mubr.bf16.gmra.mxu0 %v365
  %v486 = vpop.f32.mrf.mxu0
  %v487 = vadd.f32 %v182, %v486
  %v488 = vpop.f32.mrf.mxu0
  %v489 = vpop.f32.mrf.mxu0
  %v490 = vadd.f32 %v187, %v489
  %v491 = vpop.f32.mrf.mxu0
  %492 = vmatprep.mubr.bf16.mxu0 0
  %493 = vmatmul.mubr.bf16.gmra.mxu0 %v368
  %v494 = vpop.f32.mrf.mxu0
  %v495 = vadd.f32 %v192, %v494
  %v496 = vpop.f32.mrf.mxu0
  %v497 = vpop.f32.mrf.mxu0
  %v498 = vadd.f32 %v197, %v497
  %v499 = vpop.f32.mrf.mxu0
  %500 = vmatprep.mubr.bf16.mxu0 0
  %501 = vmatmul.mubr.bf16.gmra.mxu0 %v371
  %v502 = vpop.f32.mrf.mxu0
  %v503 = vadd.f32 %v202, %v502
  %v504 = vpop.f32.mrf.mxu0
  %v505 = vpop.f32.mrf.mxu0
  %v506 = vadd.f32 %v207, %v505
  %v507 = vpop.f32.mrf.mxu0
  %508 = vmatprep.mubr.bf16.mxu0 0
  %509 = vmatmul.mubr.bf16.gmra.mxu0 %v374
  %v510 = vpop.f32.mrf.mxu0
  %v511 = vadd.f32 %v212, %v510
  %v512 = vpop.f32.mrf.mxu0
  %v513 = vpop.f32.mrf.mxu0
  %v514 = vadd.f32 %v217, %v513
  %v515 = vpop.f32.mrf.mxu0
  %516 = vmatprep.mubr.bf16.mxu0 0
  %517 = vmatmul.mubr.bf16.gmra.mxu0 %v377
  %v518 = vpop.f32.mrf.mxu0
  %v519 = vadd.f32 %v222, %v518
  %v520 = vpop.f32.mrf.mxu0
  %v521 = vpop.f32.mrf.mxu0
  %v522 = vadd.f32 %v227, %v521
  %v523 = vpop.f32.mrf.mxu0
  %524 = vmatprep.mubr.bf16.mxu0 0
  %525 = vmatmul.mubr.bf16.gmra.mxu0 %v380
  %v526 = vpop.f32.mrf.mxu0
  %v527 = vadd.f32 %v232, %v526
  %v528 = vpop.f32.mrf.mxu0
  %v529 = vpop.f32.mrf.mxu0
  %v530 = vadd.f32 %v237, %v529
  %v531 = vpop.f32.mrf.mxu0
  %532 = vmatprep.mubr.bf16.mxu0 0
  %533 = vmatmul.mubr.bf16.gmra.mxu0 %v383
  %v534 = vpop.f32.mrf.mxu0
  %v535 = vadd.f32 %v242, %v534
  %v536 = vpop.f32.mrf.mxu0
  %v537 = vpop.f32.mrf.mxu0
  %v538 = vadd.f32 %v247, %v537
  %v539 = vpop.f32.mrf.mxu0
  %540 = vmatprep.mubr.bf16.mxu0 0
  %541 = vmatmul.mubr.bf16.gmra.mxu0 %v386
  %v542 = vpop.f32.mrf.mxu0
  %v543 = vadd.f32 %v252, %v542
  %v544 = vpop.f32.mrf.mxu0
  %v545 = vpop.f32.mrf.mxu0
  %v546 = vadd.f32 %v257, %v545
  %v547 = vpop.f32.mrf.mxu0
  %548 = vdwg.mxu0
  %v549 = vmax.f32 %v423, 0.0
  %v550 = vmax.f32 %v426, 0.0
  %v551 = vmax.f32 %v431, 0.0
  %v552 = vmax.f32 %v434, 0.0
  %v553 = vmax.f32 %v439, 0.0
  %v554 = vmax.f32 %v442, 0.0
  %v555 = vmax.f32 %v447, 0.0
  %v556 = vmax.f32 %v450, 0.0
  %v557 = vmax.f32 %v455, 0.0
  %v558 = vmax.f32 %v458, 0.0
  %v559 = vmax.f32 %v463, 0.0
  %v560 = vmax.f32 %v466, 0.0
  %v561 = vmax.f32 %v471, 0.0
  %v562 = vmax.f32 %v474, 0.0
  %v563 = vmax.f32 %v479, 0.0
  %v564 = vmax.f32 %v482, 0.0
  %v565 = vmax.f32 %v487, 0.0
  %v566 = vmax.f32 %v490, 0.0
  %v567 = vmax.f32 %v495, 0.0
  %v568 = vmax.f32 %v498, 0.0
  %v569 = vmax.f32 %v503, 0.0
  %v570 = vmax.f32 %v506, 0.0
  %v571 = vmax.f32 %v511, 0.0
  %v572 = vmax.f32 %v514, 0.0
  %v573 = vmax.f32 %v519, 0.0
  %v574 = vmax.f32 %v522, 0.0
  %v575 = vmax.f32 %v527, 0.0
  %v576 = vmax.f32 %v530, 0.0
  %v577 = vmax.f32 %v535, 0.0
  %v578 = vmax.f32 %v538, 0.0
  %v579 = vmax.f32 %v543, 0.0
  %v580 = vmax.f32 %v546, 0.0
  %v581 = vld [vmem:[%s3] sm:$0xff]
  %v582 = vld [vmem:[%s3 + $0x8] sm:$0xff]
  %v583 = vld [vmem:[%s3 + $0x10] sm:$0xff]
  %v584 = vld [vmem:[%s3 + $0x18] sm:$0xff]
  %v585 = vld [vmem:[%s3 + $0x20] sm:$0xff]
  %v586 = vld [vmem:[%s3 + $0x28] sm:$0xff]
  %v587 = vld [vmem:[%s3 + $0x30] sm:$0xff]
  %v588 = vld [vmem:[%s3 + $0x38] sm:$0xff]
  %v589 = vld [vmem:[%s3 + $0x40] sm:$0xff]
  %v590 = vld [vmem:[%s3 + $0x48] sm:$0xff]
  %v591 = vld [vmem:[%s3 + $0x50] sm:$0xff]
  %v592 = vld [vmem:[%s3 + $0x58] sm:$0xff]
  %v593 = vld [vmem:[%s3 + $0x60] sm:$0xff]
  %v594 = vld [vmem:[%s3 + $0x68] sm:$0xff]
  %v595 = vld [vmem:[%s3 + $0x70] sm:$0xff]
  %v596 = vld [vmem:[%s3 + $0x78] sm:$0xff]
  %v597 = vld [vmem:[%s3 + $0x80] sm:$0xff]
  %v598 = vld [vmem:[%s3 + $0x88] sm:$0xff]
  %v599 = vld [vmem:[%s3 + $0x90] sm:$0xff]
  %v600 = vld [vmem:[%s3 + $0x98] sm:$0xff]
  %v601 = vld [vmem:[%s3 + $0xa0] sm:$0xff]
  %v602 = vld [vmem:[%s3 + $0xa8] sm:$0xff]
  %v603 = vld [vmem:[%s3 + $0xb0] sm:$0xff]
  %v604 = vld [vmem:[%s3 + $0xb8] sm:$0xff]
  %v605 = vld [vmem:[%s3 + $0xc0] sm:$0xff]
  %v606 = vld [vmem:[%s3 + $0xc8] sm:$0xff]
  %v607 = vld [vmem:[%s3 + $0xd0] sm:$0xff]
  %v608 = vld [vmem:[%s3 + $0xd8] sm:$0xff]
  %v609 = vld [vmem:[%s3 + $0xe0] sm:$0xff]
  %v610 = vld [vmem:[%s3 + $0xe8] sm:$0xff]
  %v611 = vld [vmem:[%s3 + $0xf0] sm:$0xff]
  %v612 = vld [vmem:[%s3 + $0xf8] sm:$0xff]
  %v613 = vpack.c.bf16 %v550, %v549
  %v614 = vpack.c.bf16 %v552, %v551
  %v615 = vpack.c.bf16 %v554, %v553
  %v616 = vpack.c.bf16 %v556, %v555
  %v617 = vpack.c.bf16 %v558, %v557
  %v618 = vpack.c.bf16 %v560, %v559
  %v619 = vpack.c.bf16 %v562, %v561
  %v620 = vpack.c.bf16 %v564, %v563
  %v621 = vpack.c.bf16 %v566, %v565
  %v622 = vpack.c.bf16 %v568, %v567
  %v623 = vpack.c.bf16 %v570, %v569
  %v624 = vpack.c.bf16 %v572, %v571
  %v625 = vpack.c.bf16 %v574, %v573
  %v626 = vpack.c.bf16 %v576, %v575
  %v627 = vpack.c.bf16 %v578, %v577
  %v628 = vpack.c.bf16 %v580, %v579
  %v629 = vld [vmem:[%s4] sm:$0xff]
  %v630 = vld [vmem:[%s4 + $0x8] sm:$0xff]
  %v631 = vld [vmem:[%s4 + $0x10] sm:$0xff]
  %v632 = vld [vmem:[%s4 + $0x18] sm:$0xff]
  %v633 = vld [vmem:[%s4 + $0x20] sm:$0xff]
  %v634 = vld [vmem:[%s4 + $0x28] sm:$0xff]
  %v635 = vld [vmem:[%s4 + $0x30] sm:$0xff]
  %v636 = vld [vmem:[%s4 + $0x38] sm:$0xff]
  %v637 = vld [vmem:[%s4 + $0x40] sm:$0xff]
  %v638 = vld [vmem:[%s4 + $0x48] sm:$0xff]
  %v639 = vld [vmem:[%s4 + $0x50] sm:$0xff]
  %v640 = vld [vmem:[%s4 + $0x58] sm:$0xff]
  %v641 = vld [vmem:[%s4 + $0x60] sm:$0xff]
  %v642 = vld [vmem:[%s4 + $0x68] sm:$0xff]
  %v643 = vld [vmem:[%s4 + $0x70] sm:$0xff]
  %v644 = vld [vmem:[%s4 + $0x78] sm:$0xff]
  %v645 = vld [vmem:[%s4 + $0x80] sm:$0xff]
  %v646 = vld [vmem:[%s4 + $0x88] sm:$0xff]
  %v647 = vld [vmem:[%s4 + $0x90] sm:$0xff]
  %v648 = vld [vmem:[%s4 + $0x98] sm:$0xff]
  %v649 = vld [vmem:[%s4 + $0xa0] sm:$0xff]
  %v650 = vld [vmem:[%s4 + $0xa8] sm:$0xff]
  %v651 = vld [vmem:[%s4 + $0xb0] sm:$0xff]
  %v652 = vld [vmem:[%s4 + $0xb8] sm:$0xff]
  %v653 = vld [vmem:[%s4 + $0xc0] sm:$0xff]
  %v654 = vld [vmem:[%s4 + $0xc8] sm:$0xff]
  %v655 = vld [vmem:[%s4 + $0xd0] sm:$0xff]
  %v656 = vld [vmem:[%s4 + $0xd8] sm:$0xff]
  %v657 = vld [vmem:[%s4 + $0xe0] sm:$0xff]
  %v658 = vld [vmem:[%s4 + $0xe8] sm:$0xff]
  %v659 = vld [vmem:[%s4 + $0xf0] sm:$0xff]
  %v660 = vld [vmem:[%s4 + $0xf8] sm:$0xff]
  %662 = vset.pattern.permute.xlu0 0
  %663 = vperm.xlu0 %662, %v629
  %v664 = vpop.permute.xlu0 %663
  %667 = vset.pattern.permute.xlu0 0
  %668 = vperm.xlu0 %667, %v630
  %v669 = vpop.permute.xlu0 %668
  %672 = vset.pattern.permute.xlu0 0
  %673 = vperm.xlu0 %672, %v631
  %v674 = vpop.permute.xlu0 %673
  %677 = vset.pattern.permute.xlu0 0
  %678 = vperm.xlu0 %677, %v632
  %v679 = vpop.permute.xlu0 %678
  %682 = vset.pattern.permute.xlu0 0
  %683 = vperm.xlu0 %682, %v633
  %v684 = vpop.permute.xlu0 %683
  %687 = vset.pattern.permute.xlu0 0
  %688 = vperm.xlu0 %687, %v634
  %v689 = vpop.permute.xlu0 %688
  %692 = vset.pattern.permute.xlu0 0
  %693 = vperm.xlu0 %692, %v635
  %v694 = vpop.permute.xlu0 %693
  %697 = vset.pattern.permute.xlu0 0
  %698 = vperm.xlu0 %697, %v636
  %v699 = vpop.permute.xlu0 %698
  %702 = vset.pattern.permute.xlu0 0
  %703 = vperm.xlu0 %702, %v637
  %v704 = vpop.permute.xlu0 %703
  %707 = vset.pattern.permute.xlu0 0
  %708 = vperm.xlu0 %707, %v638
  %v709 = vpop.permute.xlu0 %708
  %712 = vset.pattern.permute.xlu0 0
  %713 = vperm.xlu0 %712, %v639
  %v714 = vpop.permute.xlu0 %713
  %717 = vset.pattern.permute.xlu0 0
  %718 = vperm.xlu0 %717, %v640
  %v719 = vpop.permute.xlu0 %718
  %722 = vset.pattern.permute.xlu0 0
  %723 = vperm.xlu0 %722, %v641
  %v724 = vpop.permute.xlu0 %723
  %727 = vset.pattern.permute.xlu0 0
  %728 = vperm.xlu0 %727, %v642
  %v729 = vpop.permute.xlu0 %728
  %732 = vset.pattern.permute.xlu0 0
  %733 = vperm.xlu0 %732, %v643
  %v734 = vpop.permute.xlu0 %733
  %737 = vset.pattern.permute.xlu0 0
  %738 = vperm.xlu0 %737, %v644
  %v739 = vpop.permute.xlu0 %738
  %742 = vset.pattern.permute.xlu0 0
  %743 = vperm.xlu0 %742, %v645
  %v744 = vpop.permute.xlu0 %743
  %747 = vset.pattern.permute.xlu0 0
  %748 = vperm.xlu0 %747, %v646
  %v749 = vpop.permute.xlu0 %748
  %752 = vset.pattern.permute.xlu0 0
  %753 = vperm.xlu0 %752, %v647
  %v754 = vpop.permute.xlu0 %753
  %757 = vset.pattern.permute.xlu0 0
  %758 = vperm.xlu0 %757, %v648
  %v759 = vpop.permute.xlu0 %758
  %762 = vset.pattern.permute.xlu0 0
  %763 = vperm.xlu0 %762, %v649
  %v764 = vpop.permute.xlu0 %763
  %767 = vset.pattern.permute.xlu0 0
  %768 = vperm.xlu0 %767, %v650
  %v769 = vpop.permute.xlu0 %768
  %772 = vset.pattern.permute.xlu0 0
  %773 = vperm.xlu0 %772, %v651
  %v774 = vpop.permute.xlu0 %773
  %777 = vset.pattern.permute.xlu0 0
  %778 = vperm.xlu0 %777, %v652
  %v779 = vpop.permute.xlu0 %778
  %782 = vset.pattern.permute.xlu0 0
  %783 = vperm.xlu0 %782, %v653
  %v784 = vpop.permute.xlu0 %783
  %787 = vset.pattern.permute.xlu0 0
  %788 = vperm.xlu0 %787, %v654
  %v789 = vpop.permute.xlu0 %788
  %792 = vset.pattern.permute.xlu0 0
  %793 = vperm.xlu0 %792, %v655
  %v794 = vpop.permute.xlu0 %793
  %797 = vset.pattern.permute.xlu0 0
  %798 = vperm.xlu0 %797, %v656
  %v799 = vpop.permute.xlu0 %798
  %802 = vset.pattern.permute.xlu0 0
  %803 = vperm.xlu0 %802, %v657
  %v804 = vpop.permute.xlu0 %803
  %807 = vset.pattern.permute.xlu0 0
  %808 = vperm.xlu0 %807, %v658
  %v809 = vpop.permute.xlu0 %808
  %812 = vset.pattern.permute.xlu0 0
  %813 = vperm.xlu0 %812, %v659
  %v814 = vpop.permute.xlu0 %813
  %817 = vset.pattern.permute.xlu0 0
  %818 = vperm.xlu0 %817, %v660
  %v819 = vpop.permute.xlu0 %818
  %v853 = vunpack.c.l.b16 %v581
  %v854 = vunpack.c.h.b16 %v581
  %v855 = vunpack.c.l.b16 %v582
  %v856 = vunpack.c.h.b16 %v582
  %v857 = vunpack.c.l.b16 %v583
  %v858 = vunpack.c.h.b16 %v583
  %v859 = vunpack.c.l.b16 %v584
  %v860 = vunpack.c.h.b16 %v584
  %v861 = vunpack.c.l.b16 %v585
  %v862 = vunpack.c.h.b16 %v585
  %v863 = vunpack.c.l.b16 %v586
  %v864 = vunpack.c.h.b16 %v586
  %v865 = vunpack.c.l.b16 %v587
  %v866 = vunpack.c.h.b16 %v587
  %v867 = vunpack.c.l.b16 %v588
  %v868 = vunpack.c.h.b16 %v588
  %v869 = vunpack.c.l.b16 %v589
  %v870 = vunpack.c.h.b16 %v589
  %v871 = vunpack.c.l.b16 %v590
  %v872 = vunpack.c.h.b16 %v590
  %v873 = vunpack.c.l.b16 %v591
  %v874 = vunpack.c.h.b16 %v591
  %v875 = vunpack.c.l.b16 %v592
  %v876 = vunpack.c.h.b16 %v592
  %v877 = vunpack.c.l.b16 %v593
  %v878 = vunpack.c.h.b16 %v593
  %v879 = vunpack.c.l.b16 %v594
  %v880 = vunpack.c.h.b16 %v594
  %v881 = vunpack.c.l.b16 %v595
  %v882 = vunpack.c.h.b16 %v595
  %v883 = vunpack.c.l.b16 %v596
  %v884 = vunpack.c.h.b16 %v596
  %v885 = vunpack.c.l.b16 %v597
  %v886 = vunpack.c.h.b16 %v597
  %v887 = vunpack.c.l.b16 %v598
  %v888 = vunpack.c.h.b16 %v598
  %v889 = vunpack.c.l.b16 %v599
  %v890 = vunpack.c.h.b16 %v599
  %v891 = vunpack.c.l.b16 %v600
  %v892 = vunpack.c.h.b16 %v600
  %v893 = vunpack.c.l.b16 %v601
  %v894 = vunpack.c.h.b16 %v601
  %v895 = vunpack.c.l.b16 %v602
  %v896 = vunpack.c.h.b16 %v602
  %v897 = vunpack.c.l.b16 %v603
  %v898 = vunpack.c.h.b16 %v603
  %v899 = vunpack.c.l.b16 %v604
  %v900 = vunpack.c.h.b16 %v604
  %v901 = vunpack.c.l.b16 %v605
  %v902 = vunpack.c.h.b16 %v605
  %v903 = vunpack.c.l.b16 %v606
  %v904 = vunpack.c.h.b16 %v606
  %v905 = vunpack.c.l.b16 %v607
  %v906 = vunpack.c.h.b16 %v607
  %v907 = vunpack.c.l.b16 %v608
  %v908 = vunpack.c.h.b16 %v608
  %v909 = vunpack.c.l.b16 %v609
  %v910 = vunpack.c.h.b16 %v609
  %v911 = vunpack.c.l.b16 %v610
  %v912 = vunpack.c.h.b16 %v610
  %v913 = vunpack.c.l.b16 %v611
  %v914 = vunpack.c.h.b16 %v611
  %v915 = vunpack.c.l.b16 %v612
  %v916 = vunpack.c.h.b16 %v612
  %v917 = vpack.c.b16 %v855, %v853
  %v918 = vpack.c.b16 %v856, %v854
  %v919 = vpack.c.b16 %v859, %v857
  %v920 = vpack.c.b16 %v860, %v858
  %v921 = vpack.c.b16 %v863, %v861
  %v922 = vpack.c.b16 %v864, %v862
  %v923 = vpack.c.b16 %v867, %v865
  %v924 = vpack.c.b16 %v868, %v866
  %v925 = vpack.c.b16 %v871, %v869
  %v926 = vpack.c.b16 %v872, %v870
  %v927 = vpack.c.b16 %v875, %v873
  %v928 = vpack.c.b16 %v876, %v874
  %v929 = vpack.c.b16 %v879, %v877
  %v930 = vpack.c.b16 %v880, %v878
  %v931 = vpack.c.b16 %v883, %v881
  %v932 = vpack.c.b16 %v884, %v882
  %v933 = vpack.c.b16 %v887, %v885
  %v934 = vpack.c.b16 %v888, %v886
  %v935 = vpack.c.b16 %v891, %v889
  %v936 = vpack.c.b16 %v892, %v890
  %v937 = vpack.c.b16 %v895, %v893
  %v938 = vpack.c.b16 %v896, %v894
  %v939 = vpack.c.b16 %v899, %v897
  %v940 = vpack.c.b16 %v900, %v898
  %v941 = vpack.c.b16 %v903, %v901
  %v942 = vpack.c.b16 %v904, %v902
  %v943 = vpack.c.b16 %v907, %v905
  %v944 = vpack.c.b16 %v908, %v906
  %v945 = vpack.c.b16 %v911, %v909
  %v946 = vpack.c.b16 %v912, %v910
  %v947 = vpack.c.b16 %v915, %v913
  %v948 = vpack.c.b16 %v916, %v914
  %981 = vmatprep.subr.bf16.mxu0 0
  %982 = vmatpush1.bf16.msra.mxu0 %v620
  %983 = vmatprep.subr.bf16.mxu0 0
  %984 = vmatpush1.bf16.msra.mxu0 %v619
  %985 = vmatprep.subr.bf16.mxu0 0
  %986 = vmatpush1.bf16.msra.mxu0 %v618
  %987 = vmatprep.subr.bf16.mxu0 0
  %988 = vmatpush1.bf16.msra.mxu0 %v617
  %989 = vmatprep.subr.bf16.mxu0 0
  %990 = vmatpush1.bf16.msra.mxu0 %v616
  %991 = vmatprep.subr.bf16.mxu0 0
  %992 = vmatpush1.bf16.msra.mxu0 %v615
  %993 = vmatprep.subr.bf16.mxu0 0
  %994 = vmatpush1.bf16.msra.mxu0 %v614
  %995 = vmatprep.subr.bf16.mxu0 0
  %996 = vmatpush1.bf16.msra.mxu0 %v613
  %997 = vmatprep.subr.bf16.mxu0 0
  %998 = vmatpush2.bf16.msra.mxu0 %v628
  %999 = vmatprep.subr.bf16.mxu0 0
  %1000 = vmatpush2.bf16.msra.mxu0 %v627
  %1001 = vmatprep.subr.bf16.mxu0 0
  %1002 = vmatpush2.bf16.msra.mxu0 %v626
  %1003 = vmatprep.subr.bf16.mxu0 0
  %1004 = vmatpush2.bf16.msra.mxu0 %v625
  %1005 = vmatprep.subr.bf16.mxu0 0
  %1006 = vmatpush2.bf16.msra.mxu0 %v624
  %1007 = vmatprep.subr.bf16.mxu0 0
  %1008 = vmatpush2.bf16.msra.mxu0 %v623
  %1009 = vmatprep.subr.bf16.mxu0 0
  %1010 = vmatpush2.bf16.msra.mxu0 %v622
  %1011 = vmatprep.subr.bf16.mxu0 0
  %1012 = vmatpush2.bf16.msra.mxu0 %v621
  %1013 = vmatprep.mubr.bf16.mxu0 %v918
  %1014 = vmatmul.mubr.bf16.gmra.mxu0 %v917
  %v1015 = vpop.f32.mrf.mxu0
  %v1016 = vadd.f32 %v664, %v1015
  %v1017 = vpop.f32.mrf.mxu0
  %v1018 = vpop.f32.mrf.mxu0
  %v1019 = vadd.f32 %v669, %v1018
  %v1020 = vpop.f32.mrf.mxu0
  %1021 = vmatprep.mubr.bf16.mxu0 %v920
  %1022 = vmatmul.mubr.bf16.gmra.mxu0 %v919
  %v1023 = vpop.f32.mrf.mxu0
  %v1024 = vadd.f32 %v674, %v1023
  %v1025 = vpop.f32.mrf.mxu0
  %v1026 = vpop.f32.mrf.mxu0
  %v1027 = vadd.f32 %v679, %v1026
  %v1028 = vpop.f32.mrf.mxu0
  %1029 = vmatprep.mubr.bf16.mxu0 %v922
  %1030 = vmatmul.mubr.bf16.gmra.mxu0 %v921
  %v1031 = vpop.f32.mrf.mxu0
  %v1032 = vadd.f32 %v684, %v1031
  %v1033 = vpop.f32.mrf.mxu0
  %v1034 = vpop.f32.mrf.mxu0
  %v1035 = vadd.f32 %v689, %v1034
  %v1036 = vpop.f32.mrf.mxu0
  %1037 = vmatprep.mubr.bf16.mxu0 %v924
  %1038 = vmatmul.mubr.bf16.gmra.mxu0 %v923
  %v1039 = vpop.f32.mrf.mxu0
  %v1040 = vadd.f32 %v694, %v1039
  %v1041 = vpop.f32.mrf.mxu0
  %v1042 = vpop.f32.mrf.mxu0
  %v1043 = vadd.f32 %v699, %v1042
  %v1044 = vpop.f32.mrf.mxu0
  %1045 = vmatprep.mubr.bf16.mxu0 %v926
  %1046 = vmatmul.mubr.bf16.gmra.mxu0 %v925
  %v1047 = vpop.f32.mrf.mxu0
  %v1048 = vadd.f32 %v704, %v1047
  %v1049 = vpop.f32.mrf.mxu0
  %v1050 = vpop.f32.mrf.mxu0
  %v1051 = vadd.f32 %v709, %v1050
  %v1052 = vpop.f32.mrf.mxu0
  %1053 = vmatprep.mubr.bf16.mxu0 %v928
  %1054 = vmatmul.mubr.bf16.gmra.mxu0 %v927
  %v1055 = vpop.f32.mrf.mxu0
  %v1056 = vadd.f32 %v714, %v1055
  %v1057 = vpop.f32.mrf.mxu0
  %v1058 = vpop.f32.mrf.mxu0
  %v1059 = vadd.f32 %v719, %v1058
  %v1060 = vpop.f32.mrf.mxu0
  %1061 = vmatprep.mubr.bf16.mxu0 %v930
  %1062 = vmatmul.mubr.bf16.gmra.mxu0 %v929
  %v1063 = vpop.f32.mrf.mxu0
  %v1064 = vadd.f32 %v724, %v1063
  %v1065 = vpop.f32.mrf.mxu0
  %v1066 = vpop.f32.mrf.mxu0
  %v1067 = vadd.f32 %v729, %v1066
  %v1068 = vpop.f32.mrf.mxu0
  %1069 = vmatprep.mubr.bf16.mxu0 %v932
  %1070 = vmatmul.mubr.bf16.gmra.mxu0 %v931
  %v1071 = vpop.f32.mrf.mxu0
  %v1072 = vadd.f32 %v734, %v1071
  %v1073 = vpop.f32.mrf.mxu0
  %v1074 = vpop.f32.mrf.mxu0
  %v1075 = vadd.f32 %v739, %v1074
  %v1076 = vpop.f32.mrf.mxu0
  %1077 = vmatprep.mubr.bf16.mxu0 %v934
  %1078 = vmatmul.mubr.bf16.gmra.mxu0 %v933
  %v1079 = vpop.f32.mrf.mxu0
  %v1080 = vadd.f32 %v744, %v1079
  %v1081 = vpop.f32.mrf.mxu0
  %v1082 = vpop.f32.mrf.mxu0
  %v1083 = vadd.f32 %v749, %v1082
  %v1084 = vpop.f32.mrf.mxu0
  %1085 = vmatprep.mubr.bf16.mxu0 %v936
  %1086 = vmatmul.mubr.bf16.gmra.mxu0 %v935
  %v1087 = vpop.f32.mrf.mxu0
  %v1088 = vadd.f32 %v754, %v1087
  %v1089 = vpop.f32.mrf.mxu0
  %v1090 = vpop.f32.mrf.mxu0
  %v1091 = vadd.f32 %v759, %v1090
  %v1092 = vpop.f32.mrf.mxu0
  %1093 = vmatprep.mubr.bf16.mxu0 %v938
  %1094 = vmatmul.mubr.bf16.gmra.mxu0 %v937
  %v1095 = vpop.f32.mrf.mxu0
  %v1096 = vadd.f32 %v764, %v1095
  %v1097 = vpop.f32.mrf.mxu0
  %v1098 = vpop.f32.mrf.mxu0
  %v1099 = vadd.f32 %v769, %v1098
  %v1100 = vpop.f32.mrf.mxu0
  %1101 = vmatprep.mubr.bf16.mxu0 %v940
  %1102 = vmatmul.mubr.bf16.gmra.mxu0 %v939
  %v1103 = vpop.f32.mrf.mxu0
  %v1104 = vadd.f32 %v774, %v1103
  %v1105 = vpop.f32.mrf.mxu0
  %v1106 = vpop.f32.mrf.mxu0
  %v1107 = vadd.f32 %v779, %v1106
  %v1108 = vpop.f32.mrf.mxu0
  %1109 = vmatprep.mubr.bf16.mxu0 %v942
  %1110 = vmatmul.mubr.bf16.gmra.mxu0 %v941
  %v1111 = vpop.f32.mrf.mxu0
  %v1112 = vadd.f32 %v784, %v1111
  %v1113 = vpop.f32.mrf.mxu0
  %v1114 = vpop.f32.mrf.mxu0
  %v1115 = vadd.f32 %v789, %v1114
  %v1116 = vpop.f32.mrf.mxu0
  %1117 = vmatprep.mubr.bf16.mxu0 %v944
  %1118 = vmatmul.mubr.bf16.gmra.mxu0 %v943
  %v1119 = vpop.f32.mrf.mxu0
  %v1120 = vadd.f32 %v794, %v1119
  %v1121 = vpop.f32.mrf.mxu0
  %v1122 = vpop.f32.mrf.mxu0
  %v1123 = vadd.f32 %v799, %v1122
  %v1124 = vpop.f32.mrf.mxu0
  %1125 = vmatprep.mubr.bf16.mxu0 %v946
  %1126 = vmatmul.mubr.bf16.gmra.mxu0 %v945
  %v1127 = vpop.f32.mrf.mxu0
  %v1128 = vadd.f32 %v804, %v1127
  %v1129 = vpop.f32.mrf.mxu0
  %v1130 = vpop.f32.mrf.mxu0
  %v1131 = vadd.f32 %v809, %v1130
  %v1132 = vpop.f32.mrf.mxu0
  %1133 = vmatprep.mubr.bf16.mxu0 %v948
  %1134 = vmatmul.mubr.bf16.gmra.mxu0 %v947
  %v1135 = vpop.f32.mrf.mxu0
  %v1136 = vadd.f32 %v814, %v1135
  %v1137 = vpop.f32.mrf.mxu0
  %v1138 = vpop.f32.mrf.mxu0
  %v1139 = vadd.f32 %v819, %v1138
  %v1140 = vpop.f32.mrf.mxu0
  %1141 = vdwg.mxu0
  %v1142 = vmax.f32 %v1016, 0.0
  %v1143 = vmax.f32 %v1019, 0.0
  %v1144 = vmax.f32 %v1024, 0.0
  %v1145 = vmax.f32 %v1027, 0.0
  %v1146 = vmax.f32 %v1032, 0.0
  %v1147 = vmax.f32 %v1035, 0.0
  %v1148 = vmax.f32 %v1040, 0.0
  %v1149 = vmax.f32 %v1043, 0.0
  %v1150 = vmax.f32 %v1048, 0.0
  %v1151 = vmax.f32 %v1051, 0.0
  %v1152 = vmax.f32 %v1056, 0.0
  %v1153 = vmax.f32 %v1059, 0.0
  %v1154 = vmax.f32 %v1064, 0.0
  %v1155 = vmax.f32 %v1067, 0.0
  %v1156 = vmax.f32 %v1072, 0.0
  %v1157 = vmax.f32 %v1075, 0.0
  %v1158 = vmax.f32 %v1080, 0.0
  %v1159 = vmax.f32 %v1083, 0.0
  %v1160 = vmax.f32 %v1088, 0.0
  %v1161 = vmax.f32 %v1091, 0.0
  %v1162 = vmax.f32 %v1096, 0.0
  %v1163 = vmax.f32 %v1099, 0.0
  %v1164 = vmax.f32 %v1104, 0.0
  %v1165 = vmax.f32 %v1107, 0.0
  %v1166 = vmax.f32 %v1112, 0.0
  %v1167 = vmax.f32 %v1115, 0.0
  %v1168 = vmax.f32 %v1120, 0.0
  %v1169 = vmax.f32 %v1123, 0.0
  %v1170 = vmax.f32 %v1128, 0.0
  %v1171 = vmax.f32 %v1131, 0.0
  %v1172 = vmax.f32 %v1136, 0.0
  %v1173 = vmax.f32 %v1139, 0.0
  %v1174 = vld [vmem:[%s5] sm:$0xff]
  %v1175 = vld [vmem:[%s5 + $0x8] sm:$0xff]
  %v1176 = vld [vmem:[%s5 + $0x10] sm:$0xff]
  %v1177 = vld [vmem:[%s5 + $0x18] sm:$0xff]
  %v1178 = vld [vmem:[%s5 + $0x20] sm:$0xff]
  %v1179 = vld [vmem:[%s5 + $0x28] sm:$0xff]
  %v1180 = vld [vmem:[%s5 + $0x30] sm:$0xff]
  %v1181 = vld [vmem:[%s5 + $0x38] sm:$0xff]
  %v1182 = vld [vmem:[%s5 + $0x40] sm:$0xff]
  %v1183 = vld [vmem:[%s5 + $0x48] sm:$0xff]
  %v1184 = vld [vmem:[%s5 + $0x50] sm:$0xff]
  %v1185 = vld [vmem:[%s5 + $0x58] sm:$0xff]
  %v1186 = vld [vmem:[%s5 + $0x60] sm:$0xff]
  %v1187 = vld [vmem:[%s5 + $0x68] sm:$0xff]
  %v1188 = vld [vmem:[%s5 + $0x70] sm:$0xff]
  %v1189 = vld [vmem:[%s5 + $0x78] sm:$0xff]
  %v1190 = vld [vmem:[%s5 + $0x80] sm:$0xff]
  %v1191 = vld [vmem:[%s5 + $0x88] sm:$0xff]
  %v1192 = vld [vmem:[%s5 + $0x90] sm:$0xff]
  %v1193 = vld [vmem:[%s5 + $0x98] sm:$0xff]
  %v1194 = vld [vmem:[%s5 + $0xa0] sm:$0xff]
  %v1195 = vld [vmem:[%s5 + $0xa8] sm:$0xff]
  %v1196 = vld [vmem:[%s5 + $0xb0] sm:$0xff]
  %v1197 = vld [vmem:[%s5 + $0xb8] sm:$0xff]
  %v1198 = vld [vmem:[%s5 + $0xc0] sm:$0xff]
  %v1199 = vld [vmem:[%s5 + $0xc8] sm:$0xff]
  %v1200 = vld [vmem:[%s5 + $0xd0] sm:$0xff]
  %v1201 = vld [vmem:[%s5 + $0xd8] sm:$0xff]
  %v1202 = vld [vmem:[%s5 + $0xe0] sm:$0xff]
  %v1203 = vld [vmem:[%s5 + $0xe8] sm:$0xff]
  %v1204 = vld [vmem:[%s5 + $0xf0] sm:$0xff]
  %v1205 = vld [vmem:[%s5 + $0xf8] sm:$0xff]
  %1207 = vset.pattern.permute.xlu0 0
  %1208 = vperm.xlu0 %1207, %v1174
  %v1209 = vpop.permute.xlu0 %1208
  %1212 = vset.pattern.permute.xlu0 0
  %1213 = vperm.xlu0 %1212, %v1175
  %v1214 = vpop.permute.xlu0 %1213
  %1217 = vset.pattern.permute.xlu0 0
  %1218 = vperm.xlu0 %1217, %v1176
  %v1219 = vpop.permute.xlu0 %1218
  %1222 = vset.pattern.permute.xlu0 0
  %1223 = vperm.xlu0 %1222, %v1177
  %v1224 = vpop.permute.xlu0 %1223
  %1227 = vset.pattern.permute.xlu0 0
  %1228 = vperm.xlu0 %1227, %v1178
  %v1229 = vpop.permute.xlu0 %1228
  %1232 = vset.pattern.permute.xlu0 0
  %1233 = vperm.xlu0 %1232, %v1179
  %v1234 = vpop.permute.xlu0 %1233
  %1237 = vset.pattern.permute.xlu0 0
  %1238 = vperm.xlu0 %1237, %v1180
  %v1239 = vpop.permute.xlu0 %1238
  %1242 = vset.pattern.permute.xlu0 0
  %1243 = vperm.xlu0 %1242, %v1181
  %v1244 = vpop.permute.xlu0 %1243
  %1247 = vset.pattern.permute.xlu0 0
  %1248 = vperm.xlu0 %1247, %v1182
  %v1249 = vpop.permute.xlu0 %1248
  %1252 = vset.pattern.permute.xlu0 0
  %1253 = vperm.xlu0 %1252, %v1183
  %v1254 = vpop.permute.xlu0 %1253
  %1257 = vset.pattern.permute.xlu0 0
  %1258 = vperm.xlu0 %1257, %v1184
  %v1259 = vpop.permute.xlu0 %1258
  %1262 = vset.pattern.permute.xlu0 0
  %1263 = vperm.xlu0 %1262, %v1185
  %v1264 = vpop.permute.xlu0 %1263
  %1267 = vset.pattern.permute.xlu0 0
  %1268 = vperm.xlu0 %1267, %v1186
  %v1269 = vpop.permute.xlu0 %1268
  %1272 = vset.pattern.permute.xlu0 0
  %1273 = vperm.xlu0 %1272, %v1187
  %v1274 = vpop.permute.xlu0 %1273
  %1277 = vset.pattern.permute.xlu0 0
  %1278 = vperm.xlu0 %1277, %v1188
  %v1279 = vpop.permute.xlu0 %1278
  %1282 = vset.pattern.permute.xlu0 0
  %1283 = vperm.xlu0 %1282, %v1189
  %v1284 = vpop.permute.xlu0 %1283
  %1287 = vset.pattern.permute.xlu0 0
  %1288 = vperm.xlu0 %1287, %v1190
  %v1289 = vpop.permute.xlu0 %1288
  %1292 = vset.pattern.permute.xlu0 0
  %1293 = vperm.xlu0 %1292, %v1191
  %v1294 = vpop.permute.xlu0 %1293
  %1297 = vset.pattern.permute.xlu0 0
  %1298 = vperm.xlu0 %1297, %v1192
  %v1299 = vpop.permute.xlu0 %1298
  %1302 = vset.pattern.permute.xlu0 0
  %1303 = vperm.xlu0 %1302, %v1193
  %v1304 = vpop.permute.xlu0 %1303
  %1307 = vset.pattern.permute.xlu0 0
  %1308 = vperm.xlu0 %1307, %v1194
  %v1309 = vpop.permute.xlu0 %1308
  %1312 = vset.pattern.permute.xlu0 0
  %1313 = vperm.xlu0 %1312, %v1195
  %v1314 = vpop.permute.xlu0 %1313
  %1317 = vset.pattern.permute.xlu0 0
  %1318 = vperm.xlu0 %1317, %v1196
  %v1319 = vpop.permute.xlu0 %1318
  %1322 = vset.pattern.permute.xlu0 0
  %1323 = vperm.xlu0 %1322, %v1197
  %v1324 = vpop.permute.xlu0 %1323
  %1327 = vset.pattern.permute.xlu0 0
  %1328 = vperm.xlu0 %1327, %v1198
  %v1329 = vpop.permute.xlu0 %1328
  %1332 = vset.pattern.permute.xlu0 0
  %1333 = vperm.xlu0 %1332, %v1199
  %v1334 = vpop.permute.xlu0 %1333
  %1337 = vset.pattern.permute.xlu0 0
  %1338 = vperm.xlu0 %1337, %v1200
  %v1339 = vpop.permute.xlu0 %1338
  %1342 = vset.pattern.permute.xlu0 0
  %1343 = vperm.xlu0 %1342, %v1201
  %v1344 = vpop.permute.xlu0 %1343
  %1347 = vset.pattern.permute.xlu0 0
  %1348 = vperm.xlu0 %1347, %v1202
  %v1349 = vpop.permute.xlu0 %1348
  %1352 = vset.pattern.permute.xlu0 0
  %1353 = vperm.xlu0 %1352, %v1203
  %v1354 = vpop.permute.xlu0 %1353
  %1357 = vset.pattern.permute.xlu0 0
  %1358 = vperm.xlu0 %1357, %v1204
  %v1359 = vpop.permute.xlu0 %1358
  %1362 = vset.pattern.permute.xlu0 0
  %1363 = vperm.xlu0 %1362, %v1205
  %v1364 = vpop.permute.xlu0 %1363
  %v1366 = vmul.f32 %v1142, %v1209
  %v1367 = vmul.f32 %v1143, %v1214
  %v1368 = vmul.f32 %v1144, %v1219
  %v1369 = vmul.f32 %v1145, %v1224
  %v1370 = vmul.f32 %v1146, %v1229
  %v1371 = vmul.f32 %v1147, %v1234
  %v1372 = vmul.f32 %v1148, %v1239
  %v1373 = vmul.f32 %v1149, %v1244
  %v1374 = vmul.f32 %v1150, %v1249
  %v1375 = vmul.f32 %v1151, %v1254
  %v1376 = vmul.f32 %v1152, %v1259
  %v1377 = vmul.f32 %v1153, %v1264
  %v1378 = vmul.f32 %v1154, %v1269
  %v1379 = vmul.f32 %v1155, %v1274
  %v1380 = vmul.f32 %v1156, %v1279
  %v1381 = vmul.f32 %v1157, %v1284
  %v1382 = vmul.f32 %v1158, %v1289
  %v1383 = vmul.f32 %v1159, %v1294
  %v1384 = vmul.f32 %v1160, %v1299
  %v1385 = vmul.f32 %v1161, %v1304
  %v1386 = vmul.f32 %v1162, %v1309
  %v1387 = vmul.f32 %v1163, %v1314
  %v1388 = vmul.f32 %v1164, %v1319
  %v1389 = vmul.f32 %v1165, %v1324
  %v1390 = vmul.f32 %v1166, %v1329
  %v1391 = vmul.f32 %v1167, %v1334
  %v1392 = vmul.f32 %v1168, %v1339
  %v1393 = vmul.f32 %v1169, %v1344
  %v1394 = vmul.f32 %v1170, %v1349
  %v1395 = vmul.f32 %v1171, %v1354
  %v1396 = vmul.f32 %v1172, %v1359
  %v1397 = vmul.f32 %v1173, %v1364
  %vm1398 = vcmask 64512
  %v1399 = vsel %vm1398, %v1366, 0.0
  %v1400 = vsel %vm1398, %v1367, 0.0
  %v1401 = vadd.f32 %v1399, %v1400
  %v1402 = vsel %vm1398, %v1368, 0.0
  %v1403 = vadd.f32 %v1401, %v1402
  %v1404 = vsel %vm1398, %v1369, 0.0
  %v1405 = vadd.f32 %v1403, %v1404
  %v1406 = vsel %vm1398, %v1370, 0.0
  %v1407 = vadd.f32 %v1405, %v1406
  %v1408 = vsel %vm1398, %v1371, 0.0
  %v1409 = vadd.f32 %v1407, %v1408
  %v1410 = vsel %vm1398, %v1372, 0.0
  %v1411 = vadd.f32 %v1409, %v1410
  %v1412 = vsel %vm1398, %v1373, 0.0
  %v1413 = vadd.f32 %v1411, %v1412
  %v1414 = vsel %vm1398, %v1374, 0.0
  %v1415 = vadd.f32 %v1413, %v1414
  %v1416 = vsel %vm1398, %v1375, 0.0
  %v1417 = vadd.f32 %v1415, %v1416
  %v1418 = vsel %vm1398, %v1376, 0.0
  %v1419 = vadd.f32 %v1417, %v1418
  %v1420 = vsel %vm1398, %v1377, 0.0
  %v1421 = vadd.f32 %v1419, %v1420
  %v1422 = vsel %vm1398, %v1378, 0.0
  %v1423 = vadd.f32 %v1421, %v1422
  %v1424 = vsel %vm1398, %v1379, 0.0
  %v1425 = vadd.f32 %v1423, %v1424
  %v1426 = vsel %vm1398, %v1380, 0.0
  %v1427 = vadd.f32 %v1425, %v1426
  %v1428 = vsel %vm1398, %v1381, 0.0
  %v1429 = vadd.f32 %v1427, %v1428
  %v1430 = vsel %vm1398, %v1382, 0.0
  %v1431 = vadd.f32 %v1429, %v1430
  %v1432 = vsel %vm1398, %v1383, 0.0
  %v1433 = vadd.f32 %v1431, %v1432
  %v1434 = vsel %vm1398, %v1384, 0.0
  %v1435 = vadd.f32 %v1433, %v1434
  %v1436 = vsel %vm1398, %v1385, 0.0
  %v1437 = vadd.f32 %v1435, %v1436
  %v1438 = vsel %vm1398, %v1386, 0.0
  %v1439 = vadd.f32 %v1437, %v1438
  %v1440 = vsel %vm1398, %v1387, 0.0
  %v1441 = vadd.f32 %v1439, %v1440
  %v1442 = vsel %vm1398, %v1388, 0.0
  %v1443 = vadd.f32 %v1441, %v1442
  %v1444 = vsel %vm1398, %v1389, 0.0
  %v1445 = vadd.f32 %v1443, %v1444
  %v1446 = vsel %vm1398, %v1390, 0.0
  %v1447 = vadd.f32 %v1445, %v1446
  %v1448 = vsel %vm1398, %v1391, 0.0
  %v1449 = vadd.f32 %v1447, %v1448
  %v1450 = vsel %vm1398, %v1392, 0.0
  %v1451 = vadd.f32 %v1449, %v1450
  %v1452 = vsel %vm1398, %v1393, 0.0
  %v1453 = vadd.f32 %v1451, %v1452
  %v1454 = vsel %vm1398, %v1394, 0.0
  %v1455 = vadd.f32 %v1453, %v1454
  %v1456 = vsel %vm1398, %v1395, 0.0
  %v1457 = vadd.f32 %v1455, %v1456
  %v1458 = vsel %vm1398, %v1396, 0.0
  %v1459 = vadd.f32 %v1457, %v1458
  %v1460 = vsel %vm1398, %v1397, 0.0
  %v1461 = vadd.f32 %v1459, %v1460
  %v1462 = vrot.slane %v1461, 4
  %v1463 = vadd.f32 %v1461, %v1462
  %v1464 = vrot.slane %v1463, 2
  %v1465 = vadd.f32 %v1463, %v1464
  %v1466 = vrot.slane %v1465, 1
  %v1467 = vadd.f32 %v1465, %v1466
  %v1468 = vld [vmem:[#allocation2] sm:$0x1]
  %1470 = vset.pattern.permute.xlu0 0
  %1471 = vperm.xlu0 %1470, %v1468
  %v1472 = vpop.permute.xlu0 %1471
  %v1474 = vlaneseq
  %v1475 = vshrl.u32 %v1474, 7
  %v1476 = vsub.s32 0, %v1475
  %v1477 = vrot.slane %v1472, %v1476
  %v1478 = vadd.f32 %v1467, %v1477
  %vm1479 = vcmask 57344
  %1480 = vst.msk [vmem:[%s7] sm:$0x1] %vm1479, %v1478
  // Predicated region
  $region30: #{soft_q_forward.1} parent=0 // pred_check
    _
  $region31: #{soft_q_forward.1} parent=0 // pred_check_branch
    %1482 = sbr.rel (0) target = $region33
  $region32: #{soft_q_forward.1} parent=0 // pred_region
    _
  $region33: #{soft_q_forward.1} parent=0 // pred_fallthru
    _
  // Predicated region
  $region34: #{soft_q_forward.1} parent=0 // pred_check
    _
  $region35: #{soft_q_forward.1} parent=0 // pred_check_branch
    %1484 = sbr.rel (0) target = $region37
  $region36: #{soft_q_forward.1} parent=0 // pred_region
    _
  $region37: #{soft_q_forward.1} parent=0 // pred_fallthru
    _

</llo_original>
